<compile_context>
chip_gen: v5e
topology: v5e:2x2
jax: 0.10.0
libtpu: 0.0.40
codegen_flags: <defaults>
</compile_context>

<pallas_src>
import jax
import jax.numpy as jnp
from jax.experimental import pallas as pl
from jax.experimental.pallas import tpu as pltpu

# Model hyper-parameters (match the nn.Module defaults).
NUM_PHONES = 50
NUM_CLASSES = 10
EMBEDDING_DIM = 32
HIDDEN_DIM = 64                                        # H
FEATURE_DIM = EMBEDDING_DIM + EMBEDDING_DIM // 2 + 3   # 32 + 16 + 3 = 51
K_PAD = 64                                             # layer-0 K padded to 8-sublane mult
H2 = 2 * HIDDEN_DIM                                    # 128 (one full lane group)
NG = 6 * HIDDEN_DIM                                    # 384 fused gate width (i|g|o) x 2 dirs
TB_MAX = 2048                                          # max batch tile


def _round_up(n, m):
    return ((n + m - 1) // m) * m


def _phone_lstm_kernel(x_ref, w0_ref, b0_ref, w1_ref, b1_ref,
                       fc1w_ref, fc1b_ref, fc2w_ref, fc2b_ref, out_ref):
    x = x_ref[...]                                                # [TB, 64] bf16

    # ---- Bidirectional LSTM layer 0: one fused [K=64, N=384] matmul --------
    # seq_len == 1 and h0 == c0 == 0  =>  f-gate and all W_hh terms vanish.
    g0 = jnp.dot(x, w0_ref[...], preferred_element_type=jnp.float32) + b0_ref[...]
    i0 = jax.nn.sigmoid(g0[:, 0 * H2:1 * H2])                     # [TB,128] = [i_f|i_b]
    gg0 = jnp.tanh(g0[:, 1 * H2:2 * H2])                          # [g_f|g_b]
    o0 = jax.nn.sigmoid(g0[:, 2 * H2:3 * H2])                     # [o_f|o_b]
    h0 = o0 * jnp.tanh(i0 * gg0)                                  # [TB,128] = [h_f|h_b]

    # ---- Bidirectional LSTM layer 1 (inter-layer dropout = identity) -------
    g1 = jnp.dot(h0.astype(jnp.bfloat16), w1_ref[...],
                 preferred_element_type=jnp.float32) + b1_ref[...]
    i1 = jax.nn.sigmoid(g1[:, 0 * H2:1 * H2])
    gg1 = jnp.tanh(g1[:, 1 * H2:2 * H2])
    o1 = jax.nn.sigmoid(g1[:, 2 * H2:3 * H2])
    h1 = o1 * jnp.tanh(i1 * gg1)                                  # [TB,128] lstm_out

    # ---- fc head: Linear(128,64) -> ReLU on MXU; Linear(64,1) on VPU/XLU ---
    z = jnp.dot(h1.astype(jnp.bfloat16), fc1w_ref[...],
                preferred_element_type=jnp.float32)
    z = jnp.maximum(z + fc1b_ref[...], 0.0)                       # [TB, 64] f32
    y = jnp.sum(z * fc2w_ref[...], axis=1, keepdims=True)         # [TB, 1] lane-reduce
    out_ref[...] = y + fc2b_ref[...]                              # [TB, 1] f32


def init_params(key):
    """Deterministic synthetic parameters with the same shapes as the module."""
    ks = jax.random.split(key, 16)
    H = HIDDEN_DIM

    def n(k, shape, scale=0.1):
        return (scale * jax.random.normal(k, shape)).astype(jnp.float32)

    params = {
        'phone_embedding': n(ks[0], (NUM_PHONES, EMBEDDING_DIM)),
        'class_embedding': n(ks[1], (NUM_CLASSES, EMBEDDING_DIM // 2)),
        # LSTM layer 0 (input FEATURE_DIM), forward + reverse directions.
        'w_ih_l0': n(ks[2], (4 * H, FEATURE_DIM)),
        'b_ih_l0': n(ks[3], (4 * H,)),
        'b_hh_l0': n(ks[4], (4 * H,)),
        'w_ih_l0_rev': n(ks[5], (4 * H, FEATURE_DIM)),
        'b_ih_l0_rev': n(ks[6], (4 * H,)),
        'b_hh_l0_rev': n(ks[7], (4 * H,)),
        # LSTM layer 1 (input 2H), forward + reverse directions.
        'w_ih_l1': n(ks[8], (4 * H, 2 * H)),
        'b_ih_l1': n(ks[9], (4 * H,)),
        'b_hh_l1': n(ks[10], (4 * H,)),
        'w_ih_l1_rev': n(ks[11], (4 * H, 2 * H)),
        'b_ih_l1_rev': n(ks[12], (4 * H,)),
        'b_hh_l1_rev': n(ks[13], (4 * H,)),
        # fc head.
        'fc1_w': n(ks[14], (H, 2 * H)),
        'fc1_b': jnp.zeros((H,), jnp.float32),
        'fc2_w': n(ks[15], (1, H)),
        'fc2_b': jnp.zeros((1,), jnp.float32),
    }
    # W_hh_* of the PyTorch LSTM are mathematically unused (h0 == 0, seq_len 1),
    # so they are not materialized.
    return params


def _fuse_direction_weights(w_f, b_ih_f, b_hh_f, w_b, b_ih_b, b_hh_b, k_pad):
    """Fuse fwd/bwd LSTM direction weights into one matmul with 128-lane gate groups.

    Column layout: [i_f i_b | g_f g_b | o_f o_b] (384 cols).  The f-gate is
    dropped and W_hh never appears: valid ONLY for seq_len == 1 with zero
    initial h/c (f * c_prev == 0, W_hh @ h0 == 0).  Do not reuse for
    multi-timestep sequences.
    """
    H = HIDDEN_DIM
    wt_f, wt_b = w_f.T, w_b.T                     # [in, 4H], cols = [i|f|g|o]
    bf = b_ih_f + b_hh_f                          # h0 == 0 -> W_hh term vanishes
    bb = b_ih_b + b_hh_b
    cols, bcols = [], []
    for g in (0, 2, 3):                           # i, g, o  (skip dead f-gate)
        cols.append(wt_f[:, g * H:(g + 1) * H])
        cols.append(wt_b[:, g * H:(g + 1) * H])
        bcols.append(bf[g * H:(g + 1) * H])
        bcols.append(bb[g * H:(g + 1) * H])
    w = jnp.concatenate(cols, axis=1)             # [in, 6H] = [in, 384]
    in_dim = w.shape[0]
    if k_pad > in_dim:
        w = jnp.pad(w, ((0, k_pad - in_dim), (0, 0)))
    b = jnp.concatenate(bcols)[None, :]           # [1, 384]
    return w.astype(jnp.bfloat16), b.astype(jnp.float32)


def _build_features_x(features, params):
    # Data-dependent embedding gather + concat stays in host-side JAX.
    phone_emb = jnp.take(params['phone_embedding'], features['phone'], axis=0)
    class_emb = jnp.take(params['class_embedding'], features['phone_class'], axis=0)
    is_first = features['is_first'][:, None].astype(jnp.float32)
    is_last = features['is_last'][:, None].astype(jnp.float32)
    word_length = features['word_length'][:, None].astype(jnp.float32)
    return jnp.concatenate([phone_emb, class_emb, is_first, is_last, word_length],
                           axis=1)                # [B, 51] f32


def phone_duration_lstm_forward(features, params):
    x = _build_features_x(features, params)
    B = x.shape[0]

    # --- host-side weight fusion / padding / bf16 cast ---
    w0, b0 = _fuse_direction_weights(params['w_ih_l0'], params['b_ih_l0'],
                                     params['b_hh_l0'], params['w_ih_l0_rev'],
                                     params['b_ih_l0_rev'], params['b_hh_l0_rev'],
                                     K_PAD)                           # [64,384], [1,384]
    w1, b1 = _fuse_direction_weights(params['w_ih_l1'], params['b_ih_l1'],
                                     params['b_hh_l1'], params['w_ih_l1_rev'],
                                     params['b_ih_l1_rev'], params['b_hh_l1_rev'],
                                     2 * HIDDEN_DIM)                  # [128,384], [1,384]
    fc1w = params['fc1_w'].T.astype(jnp.bfloat16)                     # [128, 64]
    fc1b = params['fc1_b'][None, :].astype(jnp.float32)               # [1, 64]
    fc2w = params['fc2_w'].astype(jnp.float32)                        # [1, 64] (VPU row)
    fc2b = params['fc2_b'][None, :].astype(jnp.float32)               # [1, 1]

    # --- batch tiling: multiples of 16 (bf16 sublane pack), >= 2 grid steps
    #     when the batch allows it (so both v7x TensorCores get work) ---
    B_pad = _round_up(B, 16)
    tb = max(16, min(TB_MAX, _round_up((B_pad + 1) // 2, 16)))
    B_pad = _round_up(B_pad, tb)
    xp = jnp.pad(x, ((0, B_pad - B), (0, K_PAD - FEATURE_DIM))).astype(jnp.bfloat16)
    grid = (B_pad // tb,)

    const = lambda i: (0, 0)
    out = pl.pallas_call(
        _phone_lstm_kernel,
        out_shape=jax.ShapeDtypeStruct((B_pad, 1), jnp.float32),
        grid=grid,
        in_specs=[
            pl.BlockSpec((tb, K_PAD), lambda i: (i, 0)),              # x tile
            pl.BlockSpec((K_PAD, NG), const),                         # w0   [64,384]
            pl.BlockSpec((1, NG), const),                             # b0
            pl.BlockSpec((2 * HIDDEN_DIM, NG), const),                # w1   [128,384]
            pl.BlockSpec((1, NG), const),                             # b1
            pl.BlockSpec((2 * HIDDEN_DIM, HIDDEN_DIM), const),        # fc1w [128,64]
            pl.BlockSpec((1, HIDDEN_DIM), const),                     # fc1b
            pl.BlockSpec((1, HIDDEN_DIM), const),                     # fc2w
            pl.BlockSpec((1, 1), const),                              # fc2b
        ],
        out_specs=pl.BlockSpec((tb, 1), lambda i: (i, 0)),            # per-row scalar
        compiler_params=pltpu.CompilerParams(
            dimension_semantics=("parallel",),
            vmem_limit_bytes=48 * 1024 * 1024),
    )(xp, w0, b0, w1, b1, fc1w, fc1b, fc2w, fc2b)

    return out[:B]                                                    # [B, 1] f32


def _reference_forward(features, params):
    """Pure-JAX f32 reference (unfused weights), eval-mode dropout."""
    H = HIDDEN_DIM
    x = _build_features_x(features, params)

    def cell(xin, w, bi, bh):
        g = xin @ w.T + bi + bh
        i = jax.nn.sigmoid(g[:, :H])
        gg = jnp.tanh(g[:, 2 * H:3 * H])
        o = jax.nn.sigmoid(g[:, 3 * H:])
        return o * jnp.tanh(i * gg)

    h0f = cell(x, params['w_ih_l0'], params['b_ih_l0'], params['b_hh_l0'])
    h0b = cell(x, params['w_ih_l0_rev'], params['b_ih_l0_rev'], params['b_hh_l0_rev'])
    h1in = jnp.concatenate([h0f, h0b], axis=1)
    h1f = cell(h1in, params['w_ih_l1'], params['b_ih_l1'], params['b_hh_l1'])
    h1b = cell(h1in, params['w_ih_l1_rev'], params['b_ih_l1_rev'], params['b_hh_l1_rev'])
    lstm_out = jnp.concatenate([h1f, h1b], axis=1)
    z = jnp.maximum(lstm_out @ params['fc1_w'].T + params['fc1_b'], 0.0)
    return z @ params['fc2_w'].T + params['fc2_b']


if __name__ == "__main__":
    key = jax.random.PRNGKey(0)
    pkey, k_phone, k_class, k_first, k_last, k_len = jax.random.split(key, 6)

    params = init_params(pkey)

    B = 8
    features = {
        'phone': jax.random.randint(k_phone, (B,), 0, NUM_PHONES),
        'phone_class': jax.random.randint(k_class, (B,), 0, NUM_CLASSES),
        'is_first': (jax.random.uniform(k_first, (B,)) > 0.5).astype(jnp.float32),
        'is_last': (jax.random.uniform(k_last, (B,)) < 0.3).astype(jnp.float32),
        'word_length': jax.random.uniform(k_len, (B,), minval=1.0, maxval=8.0),
    }

    out = phone_duration_lstm_forward(features, params)
    out = jax.block_until_ready(out)
    assert out.shape == (B, 1) and out.dtype == jnp.float32

    ref = _reference_forward(features, params)
    assert jnp.max(jnp.abs(out - ref)) < 5e-2, "kernel/reference mismatch"

    # TODO(synk): dropout layers are eval-mode identity (inference semantics);
    # training-mode stochastic dropout is not implemented in the kernel.
    print("KERNEL_OK")
</pallas_src>

<mosaic_0001>
module attributes {stable_mosaic.version = 11 : i64} {
  func.func @_phone_lstm_kernel(%arg0: i32, %arg1: memref<16x64xbf16, #tpu.memory_space<vmem>>, %arg2: memref<64x384xbf16, #tpu.memory_space<vmem>>, %arg3: memref<1x384xf32, #tpu.memory_space<vmem>>, %arg4: memref<128x384xbf16, #tpu.memory_space<vmem>>, %arg5: memref<1x384xf32, #tpu.memory_space<vmem>>, %arg6: memref<128x64xbf16, #tpu.memory_space<vmem>>, %arg7: memref<1x64xf32, #tpu.memory_space<vmem>>, %arg8: memref<1x64xf32, #tpu.memory_space<vmem>>, %arg9: memref<1x1xf32, #tpu.memory_space<vmem>>, %arg10: memref<16x1xf32, #tpu.memory_space<vmem>>) attributes {dimension_semantics = [#tpu.dimension_semantics<parallel>], iteration_bounds = array<i64: 1>, scalar_prefetch = 0 : i64, scratch_operands = 0 : i64, tpu.core_type = #tpu.core_type<tc>, window_params = [{transform_indices = @transform_0, window_bounds = array<i64: 16, 64>}, {pipeline_mode = #tpu.pipeline_mode<synchronous>, transform_indices = @transform_1, window_bounds = array<i64: 64, 384>}, {pipeline_mode = #tpu.pipeline_mode<synchronous>, transform_indices = @transform_2, window_bounds = array<i64: 1, 384>}, {pipeline_mode = #tpu.pipeline_mode<synchronous>, transform_indices = @transform_3, window_bounds = array<i64: 128, 384>}, {pipeline_mode = #tpu.pipeline_mode<synchronous>, transform_indices = @transform_4, window_bounds = array<i64: 1, 384>}, {pipeline_mode = #tpu.pipeline_mode<synchronous>, transform_indices = @transform_5, window_bounds = array<i64: 128, 64>}, {pipeline_mode = #tpu.pipeline_mode<synchronous>, transform_indices = @transform_6, window_bounds = array<i64: 1, 64>}, {pipeline_mode = #tpu.pipeline_mode<synchronous>, transform_indices = @transform_7, window_bounds = array<i64: 1, 64>}, {pipeline_mode = #tpu.pipeline_mode<synchronous>, transform_indices = @transform_8, window_bounds = array<i64: 1, 1>}, {transform_indices = @transform_9, window_bounds = array<i64: 16, 1>}]} {
    %c0 = arith.constant 0 : index
    %c0_0 = arith.constant 0 : index
    %0 = vector.load %arg1[%c0, %c0_0] : memref<16x64xbf16, #tpu.memory_space<vmem>>, vector<16x64xbf16>
    %c0_1 = arith.constant 0 : index
    %c0_2 = arith.constant 0 : index
    %1 = vector.load %arg2[%c0_1, %c0_2] : memref<64x384xbf16, #tpu.memory_space<vmem>>, vector<64x384xbf16>
    %cst = arith.constant dense<0.000000e+00> : vector<16x384xf32>
    %2 = tpu.matmul %0, %1, %cst {dimension_numbers = #tpu.dot_dimension_numbers<[1], [0], [0], [1], [0, 0, 1, 1], [], []>} : vector<16x64xbf16>, vector<64x384xbf16>, vector<16x384xf32> -> vector<16x384xf32>
    %c0_3 = arith.constant 0 : index
    %c0_4 = arith.constant 0 : index
    %3 = vector.load %arg3[%c0_3, %c0_4] : memref<1x384xf32, #tpu.memory_space<vmem>>, vector<1x384xf32>
    %4 = vector.broadcast %3 : vector<1x384xf32> to vector<16x384xf32>
    %5 = arith.addf %2, %4 : vector<16x384xf32>
    %6 = vector.extract_strided_slice %5 {offsets = [0, 0], sizes = [16, 128], strides = [1, 1]} : vector<16x384xf32> to vector<16x128xf32>
    %7 = arith.negf %6 : vector<16x128xf32>
    %8 = math.exp %7 : vector<16x128xf32>
    %cst_5 = arith.constant 1.000000e+00 : f32
    %9 = vector.broadcast %cst_5 : f32 to vector<16x128xf32>
    %10 = arith.addf %9, %8 : vector<16x128xf32>
    %11 = arith.divf %9, %10 : vector<16x128xf32>
    %12 = vector.extract_strided_slice %5 {offsets = [0, 128], sizes = [16, 128], strides = [1, 1]} : vector<16x384xf32> to vector<16x128xf32>
    %13 = math.tanh %12 : vector<16x128xf32>
    %14 = vector.extract_strided_slice %5 {offsets = [0, 256], sizes = [16, 128], strides = [1, 1]} : vector<16x384xf32> to vector<16x128xf32>
    %15 = arith.negf %14 : vector<16x128xf32>
    %16 = math.exp %15 : vector<16x128xf32>
    %cst_6 = arith.constant 1.000000e+00 : f32
    %17 = vector.broadcast %cst_6 : f32 to vector<16x128xf32>
    %18 = arith.addf %17, %16 : vector<16x128xf32>
    %19 = arith.divf %17, %18 : vector<16x128xf32>
    %20 = arith.mulf %11, %13 : vector<16x128xf32>
    %21 = math.tanh %20 : vector<16x128xf32>
    %22 = arith.mulf %19, %21 : vector<16x128xf32>
    %23 = arith.truncf %22 : vector<16x128xf32> to vector<16x128xbf16>
    %c0_7 = arith.constant 0 : index
    %c0_8 = arith.constant 0 : index
    %24 = vector.load %arg4[%c0_7, %c0_8] : memref<128x384xbf16, #tpu.memory_space<vmem>>, vector<128x384xbf16>
    %cst_9 = arith.constant dense<0.000000e+00> : vector<16x384xf32>
    %25 = tpu.matmul %23, %24, %cst_9 {dimension_numbers = #tpu.dot_dimension_numbers<[1], [0], [0], [1], [0, 0, 1, 1], [], []>} : vector<16x128xbf16>, vector<128x384xbf16>, vector<16x384xf32> -> vector<16x384xf32>
    %c0_10 = arith.constant 0 : index
    %c0_11 = arith.constant 0 : index
    %26 = vector.load %arg5[%c0_10, %c0_11] : memref<1x384xf32, #tpu.memory_space<vmem>>, vector<1x384xf32>
    %27 = vector.broadcast %26 : vector<1x384xf32> to vector<16x384xf32>
    %28 = arith.addf %25, %27 : vector<16x384xf32>
    %29 = vector.extract_strided_slice %28 {offsets = [0, 0], sizes = [16, 128], strides = [1, 1]} : vector<16x384xf32> to vector<16x128xf32>
    %30 = arith.negf %29 : vector<16x128xf32>
    %31 = math.exp %30 : vector<16x128xf32>
    %cst_12 = arith.constant 1.000000e+00 : f32
    %32 = vector.broadcast %cst_12 : f32 to vector<16x128xf32>
    %33 = arith.addf %32, %31 : vector<16x128xf32>
    %34 = arith.divf %32, %33 : vector<16x128xf32>
    %35 = vector.extract_strided_slice %28 {offsets = [0, 128], sizes = [16, 128], strides = [1, 1]} : vector<16x384xf32> to vector<16x128xf32>
    %36 = math.tanh %35 : vector<16x128xf32>
    %37 = vector.extract_strided_slice %28 {offsets = [0, 256], sizes = [16, 128], strides = [1, 1]} : vector<16x384xf32> to vector<16x128xf32>
    %38 = arith.negf %37 : vector<16x128xf32>
    %39 = math.exp %38 : vector<16x128xf32>
    %cst_13 = arith.constant 1.000000e+00 : f32
    %40 = vector.broadcast %cst_13 : f32 to vector<16x128xf32>
    %41 = arith.addf %40, %39 : vector<16x128xf32>
    %42 = arith.divf %40, %41 : vector<16x128xf32>
    %43 = arith.mulf %34, %36 : vector<16x128xf32>
    %44 = math.tanh %43 : vector<16x128xf32>
    %45 = arith.mulf %42, %44 : vector<16x128xf32>
    %46 = arith.truncf %45 : vector<16x128xf32> to vector<16x128xbf16>
    %c0_14 = arith.constant 0 : index
    %c0_15 = arith.constant 0 : index
    %47 = vector.load %arg6[%c0_14, %c0_15] : memref<128x64xbf16, #tpu.memory_space<vmem>>, vector<128x64xbf16>
    %cst_16 = arith.constant dense<0.000000e+00> : vector<16x64xf32>
    %48 = tpu.matmul %46, %47, %cst_16 {dimension_numbers = #tpu.dot_dimension_numbers<[1], [0], [0], [1], [0, 0, 1, 1], [], []>} : vector<16x128xbf16>, vector<128x64xbf16>, vector<16x64xf32> -> vector<16x64xf32>
    %c0_17 = arith.constant 0 : index
    %c0_18 = arith.constant 0 : index
    %49 = vector.load %arg7[%c0_17, %c0_18] : memref<1x64xf32, #tpu.memory_space<vmem>>, vector<1x64xf32>
    %50 = vector.broadcast %49 : vector<1x64xf32> to vector<16x64xf32>
    %51 = arith.addf %48, %50 : vector<16x64xf32>
    %cst_19 = arith.constant 0.000000e+00 : f32
    %52 = vector.broadcast %cst_19 : f32 to vector<16x64xf32>
    %53 = arith.maximumf %51, %52 : vector<16x64xf32>
    %c0_20 = arith.constant 0 : index
    %c0_21 = arith.constant 0 : index
    %54 = vector.load %arg8[%c0_20, %c0_21] : memref<1x64xf32, #tpu.memory_space<vmem>>, vector<1x64xf32>
    %55 = vector.broadcast %54 : vector<1x64xf32> to vector<16x64xf32>
    %56 = arith.mulf %53, %55 : vector<16x64xf32>
    %cst_22 = arith.constant dense<0.000000e+00> : vector<16xf32>
    %57 = vector.multi_reduction <add>, %56, %cst_22 [1] : vector<16x64xf32> to vector<16xf32>
    %58 = vector.shape_cast %57 : vector<16xf32> to vector<16x1xf32>
    %c0_23 = arith.constant 0 : index
    %c0_24 = arith.constant 0 : index
    %59 = vector.load %arg9[%c0_23, %c0_24] : memref<1x1xf32, #tpu.memory_space<vmem>>, vector<1x1xf32>
    %60 = vector.broadcast %59 : vector<1x1xf32> to vector<16x1xf32>
    %61 = arith.addf %58, %60 : vector<16x1xf32>
    %c0_25 = arith.constant 0 : index
    %c0_26 = arith.constant 0 : index
    %62 = vector.load %arg10[%c0_25, %c0_26] : memref<16x1xf32, #tpu.memory_space<vmem>>, vector<16x1xf32>
    tpu.vector_store %arg10[%c0_25, %c0_26], %61 {strides = array<i32>} : memref<16x1xf32, #tpu.memory_space<vmem>>, vector<16x1xf32>,
    return
  }
  func.func @transform_0(%arg0: i32) -> (i32, i32) {
    %c0_i32 = arith.constant 0 : i32
    %c0_i32_0 = arith.constant 0 : i32
    return %arg0, %c0_i32 : i32, i32
  }
  func.func @transform_1(%arg0: i32) -> (i32, i32) {
    %c0_i32 = arith.constant 0 : i32
    %c0_i32_0 = arith.constant 0 : i32
    %c0_i32_1 = arith.constant 0 : i32
    return %c0_i32, %c0_i32_0 : i32, i32
  }
  func.func @transform_2(%arg0: i32) -> (i32, i32) {
    %c0_i32 = arith.constant 0 : i32
    %c0_i32_0 = arith.constant 0 : i32
    %c0_i32_1 = arith.constant 0 : i32
    return %c0_i32, %c0_i32_0 : i32, i32
  }
  func.func @transform_3(%arg0: i32) -> (i32, i32) {
    %c0_i32 = arith.constant 0 : i32
    %c0_i32_0 = arith.constant 0 : i32
    %c0_i32_1 = arith.constant 0 : i32
    return %c0_i32, %c0_i32_0 : i32, i32
  }
  func.func @transform_4(%arg0: i32) -> (i32, i32) {
    %c0_i32 = arith.constant 0 : i32
    %c0_i32_0 = arith.constant 0 : i32
    %c0_i32_1 = arith.constant 0 : i32
    return %c0_i32, %c0_i32_0 : i32, i32
  }
  func.func @transform_5(%arg0: i32) -> (i32, i32) {
    %c0_i32 = arith.constant 0 : i32
    %c0_i32_0 = arith.constant 0 : i32
    %c0_i32_1 = arith.constant 0 : i32
    return %c0_i32, %c0_i32_0 : i32, i32
  }
  func.func @transform_6(%arg0: i32) -> (i32, i32) {
    %c0_i32 = arith.constant 0 : i32
    %c0_i32_0 = arith.constant 0 : i32
    %c0_i32_1 = arith.constant 0 : i32
    return %c0_i32, %c0_i32_0 : i32, i32
  }
  func.func @transform_7(%arg0: i32) -> (i32, i32) {
    %c0_i32 = arith.constant 0 : i32
    %c0_i32_0 = arith.constant 0 : i32
    %c0_i32_1 = arith.constant 0 : i32
    return %c0_i32, %c0_i32_0 : i32, i32
  }
  func.func @transform_8(%arg0: i32) -> (i32, i32) {
    %c0_i32 = arith.constant 0 : i32
    %c0_i32_0 = arith.constant 0 : i32
    %c0_i32_1 = arith.constant 0 : i32
    return %c0_i32, %c0_i32_0 : i32, i32
  }
  func.func @transform_9(%arg0: i32) -> (i32, i32) {
    %c0_i32 = arith.constant 0 : i32
    %c0_i32_0 = arith.constant 0 : i32
    return %arg0, %c0_i32 : i32, i32
  }
}

</mosaic_0001>

<llo_original>
// kernel: tpu_custom_call.1
$region0: #{tpu_custom_call.1}
  #allocation0 [shape = 'u32[]', space=smem, size = 0x4, offset = 0x4, fixed_abs, tag = 'smem constant byte address 0x4 - core index']
  #allocation1 [shape = 'u32[72,128]{1,0:T(1,128)}', space=vmem, size = 0x9000, scoped, tag = 'internal scratch']
  #allocation2 [shape = 'f32[1,1]{1,0:T(1,128)S(1)}', space=vmem, size = 0x200, scoped, tag = 'scoped memory for tpu_custom_call.1']
  %s0 = inlined_call_operand.hbm [shape: bf16[16,64], index: 0, kind: input, shape index: {}]
  %s1 = inlined_call_operand.vmem [shape: bf16[64,384], index: 1, kind: input, shape index: {}]
  %s2 = inlined_call_operand.vmem [shape: f32[1,384], index: 2, kind: input, shape index: {}]
  %s3 = inlined_call_operand.hbm [shape: bf16[128,384], index: 3, kind: input, shape index: {}]
  %s4 = inlined_call_operand.hbm [shape: f32[1,384], index: 4, kind: input, shape index: {}]
  %s5 = inlined_call_operand.vmem [shape: bf16[128,64], index: 5, kind: input, shape index: {}]
  %s6 = inlined_call_operand.vmem [shape: f32[1,64], index: 6, kind: input, shape index: {}]
  %s7 = inlined_call_operand.vmem [shape: f32[1,64], index: 7, kind: input, shape index: {}]
  %s8 = inlined_call_operand.<no memory space> [shape: f32[1,1], index: 8, kind: input, shape index: {}]
  %s9 = inlined_call_operand.vmem [shape: f32[16,1], index: 9, kind: output, shape index: {}]
  %s10 = sld [smem:[#allocation0]]
  $region58: #{tpu_custom_call.1} parent=0
    _
  %s12 = ssub.s32 1, %s10
  %s13 = scalar_select 0, %s12, %s10
  %v14 = vstv %s8
  %15 = vst [vmem:[#allocation2] sm:$0x1] %v14
  $region1: #{tpu_custom_call.1} parent=0
    #allocation3 [shape = 'u8[4096]{0}', space=vmem, size = 0x1000, scoped, tag = 'input window, operand 0, single buffered']
    #allocation4 [shape = 's32[1]{0}', space=sflag, size = 0x4, scoped, tag = 'scoped memory for tpu_custom_call.1']
    #allocation5 [shape = 'u8[98304]{0}', space=vmem, size = 0x18000, scoped, tag = 'input window, operand 3, single buffered']
    #allocation6 [shape = 's32[1]{0}', space=sflag, size = 0x4, scoped, tag = 'scoped memory for tpu_custom_call.1']
    #allocation7 [shape = 'u8[1536]{0}', space=vmem, size = 0x800, scoped, tag = 'input window, operand 4, single buffered']
    %16 = vsyncpa [#allocation4], 0
    %17 = vsyncpa [#allocation6], 0
    // Predicated region
    $region2: #{tpu_custom_call.1} parent=1 // pred_check
      _
    $region3: #{tpu_custom_call.1} parent=1 // pred_check_branch
      %19 = sbr.rel (0) target = $region5
    $region4: #{tpu_custom_call.1} parent=1 // pred_region
      %21 = vsyncadd [#allocation4], 0
      %s22 = sshll.u32 %s0, 4
      %s23 = int_to_ptr.hbm [resolvable:$true] %s22
      %s24 = sshll.u32 [#allocation3], 4
      %s25 = int_to_ptr.vmem [resolvable:$true] %s24
      %30 = dma.hbm_to_vmem [thread:$0]  %s23, 128, %s25, [#allocation4], 64, 64, 4
    $region5: #{tpu_custom_call.1} parent=1 // pred_fallthru
      _
    // Predicated region
    $region6: #{tpu_custom_call.1} parent=1 // pred_check
      _
    $region7: #{tpu_custom_call.1} parent=1 // pred_check_branch
      %32 = sbr.rel (0) target = $region9
    $region8: #{tpu_custom_call.1} parent=1 // pred_region
      _
    $region9: #{tpu_custom_call.1} parent=1 // pred_fallthru
      _
    // Predicated region
    $region10: #{tpu_custom_call.1} parent=1 // pred_check
      _
    $region11: #{tpu_custom_call.1} parent=1 // pred_check_branch
      %34 = sbr.rel (0) target = $region13
    $region12: #{tpu_custom_call.1} parent=1 // pred_region
      _
    $region13: #{tpu_custom_call.1} parent=1 // pred_fallthru
      _
    // Predicated region
    $region14: #{tpu_custom_call.1} parent=1 // pred_check
      _
    $region15: #{tpu_custom_call.1} parent=1 // pred_check_branch
      %36 = sbr.rel (0) target = $region17
    $region16: #{tpu_custom_call.1} parent=1 // pred_region
      %38 = vsyncadd [#allocation6], 0
      %s39 = sshll.u32 %s3, 4
      %s40 = int_to_ptr.hbm [resolvable:$true] %s39
      %s41 = sshll.u32 [#allocation5], 4
      %s42 = int_to_ptr.vmem [resolvable:$true] %s41
      %47 = dma.hbm_to_vmem [thread:$0]  %s40, 3072, %s42, [#allocation6], 192, 192, 12
    $region17: #{tpu_custom_call.1} parent=1 // pred_fallthru
      _
    // Predicated region
    $region18: #{tpu_custom_call.1} parent=1 // pred_check
      _
    $region19: #{tpu_custom_call.1} parent=1 // pred_check_branch
      %49 = sbr.rel (0) target = $region21
    $region20: #{tpu_custom_call.1} parent=1 // pred_region
      %51 = vsyncadd [#allocation6], 0
      %s53 = sshll.u32 %s4, 4
      %s54 = int_to_ptr.hbm [resolvable:$true] %s53
      %s55 = sshll.u32 [#allocation7], 4
      %s56 = int_to_ptr.vmem [resolvable:$true] %s55
      %58 = dma.hbm_to_vmem [thread:$0]  %s54, 48, %s56, [#allocation6]
    $region21: #{tpu_custom_call.1} parent=1 // pred_fallthru
      _
    // Predicated region
    $region22: #{tpu_custom_call.1} parent=1 // pred_check
      _
    $region23: #{tpu_custom_call.1} parent=1 // pred_check_branch
      %60 = sbr.rel (0) target = $region25
    $region24: #{tpu_custom_call.1} parent=1 // pred_region
      _
    $region25: #{tpu_custom_call.1} parent=1 // pred_fallthru
      _
    // Predicated region
    $region26: #{tpu_custom_call.1} parent=1 // pred_check
      _
    $region27: #{tpu_custom_call.1} parent=1 // pred_check_branch
      %62 = sbr.rel (0) target = $region29
    $region28: #{tpu_custom_call.1} parent=1 // pred_region
      _
    $region29: #{tpu_custom_call.1} parent=1 // pred_fallthru
      _
    // Predicated region
    $region30: #{tpu_custom_call.1} parent=1 // pred_check
      _
    $region31: #{tpu_custom_call.1} parent=1 // pred_check_branch
      %64 = sbr.rel (0) target = $region33
    $region32: #{tpu_custom_call.1} parent=1 // pred_region
      _
    $region33: #{tpu_custom_call.1} parent=1 // pred_fallthru
      _
    // Predicated region
    $region34: #{tpu_custom_call.1} parent=1 // pred_check
      _
    $region35: #{tpu_custom_call.1} parent=1 // pred_check_branch
      %66 = sbr.rel (0) target = $region37
    $region36: #{tpu_custom_call.1} parent=1 // pred_region
      _
    $region37: #{tpu_custom_call.1} parent=1 // pred_fallthru
      _
    // Predicated region
    $region38: #{tpu_custom_call.1} parent=1 // pred_check
      _
    $region39: #{tpu_custom_call.1} parent=1 // pred_check_branch
      %68 = sbr.rel (0) target = $region41
    $region40: #{tpu_custom_call.1} parent=1 // pred_region
      %70 = dma.done [#allocation4], 128
    $region41: #{tpu_custom_call.1} parent=1 // pred_fallthru
      _
    // Predicated region
    $region42: #{tpu_custom_call.1} parent=1 // pred_check
      _
    $region43: #{tpu_custom_call.1} parent=1 // pred_check_branch
      %72 = sbr.rel (0) target = $region45
    $region44: #{tpu_custom_call.1} parent=1 // pred_region
      %74 = dma.done [#allocation6], 3072
    $region45: #{tpu_custom_call.1} parent=1 // pred_fallthru
      _
    // Predicated region
    $region46: #{tpu_custom_call.1} parent=1 // pred_check
      _
    $region47: #{tpu_custom_call.1} parent=1 // pred_check_branch
      %76 = sbr.rel (0) target = $region49
    $region48: #{tpu_custom_call.1} parent=1 // pred_region
      %78 = dma.done [#allocation6], 48
    $region49: #{tpu_custom_call.1} parent=1 // pred_fallthru
      _
    %v80 = vld [vmem:[#allocation3] sm:$0xf]
    %v81 = vld [vmem:[#allocation3 + $0x4] sm:$0xf]
    %v82 = vld [vmem:[%s1] sm:$0xff]
    %v83 = vld [vmem:[%s1 + $0x8] sm:$0xf]
    %v84 = vld [vmem:[%s1 + $0xc] sm:$0xff]
    %v85 = vld [vmem:[%s1 + $0x14] sm:$0xf]
    %v86 = vld [vmem:[%s1 + $0x18] sm:$0xff]
    %v87 = vld [vmem:[%s1 + $0x20] sm:$0xf]
    %v88 = vld [vmem:[%s1 + $0x24] sm:$0xff]
    %v89 = vld [vmem:[%s1 + $0x2c] sm:$0xf]
    %v90 = vld [vmem:[%s1 + $0x30] sm:$0xff]
    %v91 = vld [vmem:[%s1 + $0x38] sm:$0xf]
    %v92 = vld [vmem:[%s1 + $0x3c] sm:$0xff]
    %v93 = vld [vmem:[%s1 + $0x44] sm:$0xf]
    %v94 = vld [vmem:[%s1 + $0x48] sm:$0xff]
    %v95 = vld [vmem:[%s1 + $0x50] sm:$0xf]
    %v96 = vld [vmem:[%s1 + $0x54] sm:$0xff]
    %v97 = vld [vmem:[%s1 + $0x5c] sm:$0xf]
    %v98 = vld [vmem:[%s2] sm:$0x7]
    %v100 = vperm.slane %v98, 0
    %v101 = vperm.slane %v98, 1
    %v102 = vperm.slane %v98, 2
    %v108 = vunpack.c.l.b16 %v80
    %v109 = vunpack.c.l.b16 %v81
    %v110 = vpack.c.b16 %v109, %v108
    %v127 = vunpack.c.l.b16 %v82
    %v128 = vunpack.c.h.b16 %v82
    %v129 = vunpack.c.l.b16 %v83
    %v130 = vunpack.c.l.b16 %v84
    %v131 = vunpack.c.h.b16 %v84
    %v132 = vunpack.c.l.b16 %v85
    %v133 = vunpack.c.l.b16 %v86
    %v134 = vunpack.c.h.b16 %v86
    %v135 = vunpack.c.l.b16 %v87
    %v136 = vunpack.c.l.b16 %v88
    %v137 = vunpack.c.h.b16 %v88
    %v138 = vunpack.c.l.b16 %v89
    %v139 = vunpack.c.l.b16 %v90
    %v140 = vunpack.c.h.b16 %v90
    %v141 = vunpack.c.l.b16 %v91
    %v142 = vunpack.c.l.b16 %v92
    %v143 = vunpack.c.h.b16 %v92
    %v144 = vunpack.c.l.b16 %v93
    %v145 = vunpack.c.l.b16 %v94
    %v146 = vunpack.c.h.b16 %v94
    %v147 = vunpack.c.l.b16 %v95
    %v148 = vunpack.c.l.b16 %v96
    %v149 = vunpack.c.h.b16 %v96
    %v150 = vunpack.c.l.b16 %v97
    %v151 = vpack.c.b16 %v130, %v127
    %v152 = vpack.c.b16 %v131, %v128
    %v153 = vpack.c.b16 %v132, %v129
    %v154 = vpack.c.b16 %v136, %v133
    %v155 = vpack.c.b16 %v137, %v134
    %v156 = vpack.c.b16 %v138, %v135
    %v157 = vpack.c.b16 %v142, %v139
    %v158 = vpack.c.b16 %v143, %v140
    %v159 = vpack.c.b16 %v144, %v141
    %v160 = vpack.c.b16 %v148, %v145
    %v161 = vpack.c.b16 %v149, %v146
    %v162 = vpack.c.b16 %v150, %v147
    %vm175 = vcmask 523264
    %v177 = vsel %vm175, %v110, 0
    %179 = vmatpush.bf16.msra.mxu0 0
    %180 = vmatpush.bf16.msra.mxu0 0
    %181 = vmatpush.bf16.msra.mxu0 0
    %182 = vmatpush.bf16.msra.mxu0 0
    %183 = vmatpush.bf16.msra.mxu0 %v160
    %184 = vmatpush.bf16.msra.mxu0 %v157
    %185 = vmatpush.bf16.msra.mxu0 %v154
    %186 = vmatpush.bf16.msra.mxu0 %v151
    %187 = vmatmul.bf16.gmra.mxu0 %v177
    %v188 = vpop.f32.mrf.mxu0
    %v189 = vadd.f32 %v100, %v188
    %v190 = vpop.f32.mrf.mxu0
    %v191 = vadd.f32 %v100, %v190
    %192 = vdwg.mxu0
    %193 = vmatpush.bf16.msra.mxu0 0
    %194 = vmatpush.bf16.msra.mxu0 0
    %195 = vmatpush.bf16.msra.mxu0 0
    %196 = vmatpush.bf16.msra.mxu0 0
    %197 = vmatpush.bf16.msra.mxu0 %v161
    %198 = vmatpush.bf16.msra.mxu0 %v158
    %199 = vmatpush.bf16.msra.mxu0 %v155
    %200 = vmatpush.bf16.msra.mxu0 %v152
    %201 = vmatmul.bf16.gmra.mxu0 %v177
    %v202 = vpop.f32.mrf.mxu0
    %v203 = vadd.f32 %v101, %v202
    %v204 = vpop.f32.mrf.mxu0
    %v205 = vadd.f32 %v101, %v204
    %206 = vdwg.mxu0
    %207 = vmatpush.bf16.msra.mxu0 0
    %208 = vmatpush.bf16.msra.mxu0 0
    %209 = vmatpush.bf16.msra.mxu0 0
    %210 = vmatpush.bf16.msra.mxu0 0
    %211 = vmatpush.bf16.msra.mxu0 %v162
    %212 = vmatpush.bf16.msra.mxu0 %v159
    %213 = vmatpush.bf16.msra.mxu0 %v156
    %214 = vmatpush.bf16.msra.mxu0 %v153
    %215 = vmatmul.bf16.gmra.mxu0 %v177
    %v216 = vpop.f32.mrf.mxu0
    %v217 = vadd.f32 %v102, %v216
    %v218 = vpop.f32.mrf.mxu0
    %v219 = vadd.f32 %v102, %v218
    %220 = vdwg.mxu0
    %v221 = vxor.u32 %v189, 2147483648
    %v222 = vxor.u32 %v191, 2147483648
    %v223 = vmul.f32 %v221, 1.442695
    %v224 = vpow.pop %v223
    %v225 = vmul.f32 %v222, 1.442695
    %v226 = vpow.pop %v225
    %v227 = vadd.f32 %v224, 1.0
    %v228 = vadd.f32 %v226, 1.0
    %v229 = vrcp.pop %v227
    %v230 = vmul.f32 %v227, %v229
    %v231 = vsub.f32 1.0, %v230
    %v232 = vmul.f32 %v229, %v231
    %v233 = vadd.f32 %v229, %v232
    %vm234 = vweird.f32 %v227
    %vm235 = vweird.f32 %v229
    %vm236 = vmor %vm234, %vm235
    %v237 = vsel %vm236, %v229, %v233
    %v238 = vand.u32 2147483647, %v227
    %vm239 = vcmp.eq.f32.partialorder %v238, 8.507059e+37
    %v240 = vand.u32 %v227, 2147483648
    %v241 = vor.u32 1.1754944e-38, %v240
    %v242 = vsel %vm239, %v241, %v237
    %v243 = vmul.f32 1.0, %v242
    %v244 = vrcp.pop %v228
    %v245 = vmul.f32 %v228, %v244
    %v246 = vsub.f32 1.0, %v245
    %v247 = vmul.f32 %v244, %v246
    %v248 = vadd.f32 %v244, %v247
    %vm249 = vweird.f32 %v228
    %vm250 = vweird.f32 %v244
    %vm251 = vmor %vm249, %vm250
    %v252 = vsel %vm251, %v244, %v248
    %v253 = vand.u32 2147483647, %v228
    %vm254 = vcmp.eq.f32.partialorder %v253, 8.507059e+37
    %v255 = vand.u32 %v228, 2147483648
    %v256 = vor.u32 1.1754944e-38, %v255
    %v257 = vsel %vm254, %v256, %v252
    %v258 = vmul.f32 1.0, %v257
    %v259 = vtanh.pop %v203
    %v260 = vtanh.pop %v205
    %v261 = vxor.u32 %v217, 2147483648
    %v262 = vxor.u32 %v219, 2147483648
    %v263 = vmul.f32 %v261, 1.442695
    %v264 = vpow.pop %v263
    %v265 = vmul.f32 %v262, 1.442695
    %v266 = vpow.pop %v265
    %v267 = vadd.f32 %v264, 1.0
    %v268 = vadd.f32 %v266, 1.0
    %v269 = vrcp.pop %v267
    %v270 = vmul.f32 %v267, %v269
    %v271 = vsub.f32 1.0, %v270
    %v272 = vmul.f32 %v269, %v271
    %v273 = vadd.f32 %v269, %v272
    %vm274 = vweird.f32 %v267
    %vm275 = vweird.f32 %v269
    %vm276 = vmor %vm274, %vm275
    %v277 = vsel %vm276, %v269, %v273
    %v278 = vand.u32 2147483647, %v267
    %vm279 = vcmp.eq.f32.partialorder %v278, 8.507059e+37
    %v280 = vand.u32 %v267, 2147483648
    %v281 = vor.u32 1.1754944e-38, %v280
    %v282 = vsel %vm279, %v281, %v277
    %v283 = vmul.f32 1.0, %v282
    %v284 = vrcp.pop %v268
    %v285 = vmul.f32 %v268, %v284
    %v286 = vsub.f32 1.0, %v285
    %v287 = vmul.f32 %v284, %v286
    %v288 = vadd.f32 %v284, %v287
    %vm289 = vweird.f32 %v268
    %vm290 = vweird.f32 %v284
    %vm291 = vmor %vm289, %vm290
    %v292 = vsel %vm291, %v284, %v288
    %v293 = vand.u32 2147483647, %v268
    %vm294 = vcmp.eq.f32.partialorder %v293, 8.507059e+37
    %v295 = vand.u32 %v268, 2147483648
    %v296 = vor.u32 1.1754944e-38, %v295
    %v297 = vsel %vm294, %v296, %v292
    %v298 = vmul.f32 1.0, %v297
    %v299 = vmul.f32 %v243, %v259
    %v300 = vmul.f32 %v258, %v260
    %v301 = vtanh.pop %v299
    %v302 = vtanh.pop %v300
    %v303 = vmul.f32 %v283, %v301
    %v304 = vmul.f32 %v298, %v302
    %v305 = vpack.c.bf16 %v304, %v303
    %v306 = vld [vmem:[#allocation5] sm:$0xff]
    %v307 = vld [vmem:[#allocation5 + $0x8] sm:$0xf]
    %v308 = vld [vmem:[#allocation5 + $0xc] sm:$0xff]
    %v309 = vld [vmem:[#allocation5 + $0x14] sm:$0xf]
    %v310 = vld [vmem:[#allocation5 + $0x18] sm:$0xff]
    %v311 = vld [vmem:[#allocation5 + $0x20] sm:$0xf]
    %v312 = vld [vmem:[#allocation5 + $0x24] sm:$0xff]
    %v313 = vld [vmem:[#allocation5 + $0x2c] sm:$0xf]
    %v314 = vld [vmem:[#allocation5 + $0x30] sm:$0xff]
    %v315 = vld [vmem:[#allocation5 + $0x38] sm:$0xf]
    %v316 = vld [vmem:[#allocation5 + $0x3c] sm:$0xff]
    %v317 = vld [vmem:[#allocation5 + $0x44] sm:$0xf]
    %v318 = vld [vmem:[#allocation5 + $0x48] sm:$0xff]
    %v319 = vld [vmem:[#allocation5 + $0x50] sm:$0xf]
    %v320 = vld [vmem:[#allocation5 + $0x54] sm:$0xff]
    %v321 = vld [vmem:[#allocation5 + $0x5c] sm:$0xf]
    %v322 = vld [vmem:[#allocation5 + $0x60] sm:$0xff]
    %v323 = vld [vmem:[#allocation5 + $0x68] sm:$0xf]
    %v324 = vld [vmem:[#allocation5 + $0x6c] sm:$0xff]
    %v325 = vld [vmem:[#allocation5 + $0x74] sm:$0xf]
    %v326 = vld [vmem:[#allocation5 + $0x78] sm:$0xff]
    %v327 = vld [vmem:[#allocation5 + $0x80] sm:$0xf]
    %v328 = vld [vmem:[#allocation5 + $0x84] sm:$0xff]
    %v329 = vld [vmem:[#allocation5 + $0x8c] sm:$0xf]
    %v330 = vld [vmem:[#allocation5 + $0x90] sm:$0xff]
    %v331 = vld [vmem:[#allocation5 + $0x98] sm:$0xf]
    %v332 = vld [vmem:[#allocation5 + $0x9c] sm:$0xff]
    %v333 = vld [vmem:[#allocation5 + $0xa4] sm:$0xf]
    %v334 = vld [vmem:[#allocation5 + $0xa8] sm:$0xff]
    %v335 = vld [vmem:[#allocation5 + $0xb0] sm:$0xf]
    %v336 = vld [vmem:[#allocation5 + $0xb4] sm:$0xff]
    %v337 = vld [vmem:[#allocation5 + $0xbc] sm:$0xf]
    %v338 = vld [vmem:[#allocation7] sm:$0x7]
    %v340 = vperm.slane %v338, 0
    %v341 = vperm.slane %v338, 1
    %v342 = vperm.slane %v338, 2
    %v378 = vunpack.c.l.b16 %v306
    %v379 = vunpack.c.h.b16 %v306
    %v380 = vunpack.c.l.b16 %v307
    %v381 = vunpack.c.l.b16 %v308
    %v382 = vunpack.c.h.b16 %v308
    %v383 = vunpack.c.l.b16 %v309
    %v384 = vunpack.c.l.b16 %v310
    %v385 = vunpack.c.h.b16 %v310
    %v386 = vunpack.c.l.b16 %v311
    %v387 = vunpack.c.l.b16 %v312
    %v388 = vunpack.c.h.b16 %v312
    %v389 = vunpack.c.l.b16 %v313
    %v390 = vunpack.c.l.b16 %v314
    %v391 = vunpack.c.h.b16 %v314
    %v392 = vunpack.c.l.b16 %v315
    %v393 = vunpack.c.l.b16 %v316
    %v394 = vunpack.c.h.b16 %v316
    %v395 = vunpack.c.l.b16 %v317
    %v396 = vunpack.c.l.b16 %v318
    %v397 = vunpack.c.h.b16 %v318
    %v398 = vunpack.c.l.b16 %v319
    %v399 = vunpack.c.l.b16 %v320
    %v400 = vunpack.c.h.b16 %v320
    %v401 = vunpack.c.l.b16 %v321
    %v402 = vunpack.c.l.b16 %v322
    %v403 = vunpack.c.h.b16 %v322
    %v404 = vunpack.c.l.b16 %v323
    %v405 = vunpack.c.l.b16 %v324
    %v406 = vunpack.c.h.b16 %v324
    %v407 = vunpack.c.l.b16 %v325
    %v408 = vunpack.c.l.b16 %v326
    %v409 = vunpack.c.h.b16 %v326
    %v410 = vunpack.c.l.b16 %v327
    %v411 = vunpack.c.l.b16 %v328
    %v412 = vunpack.c.h.b16 %v328
    %v413 = vunpack.c.l.b16 %v329
    %v414 = vunpack.c.l.b16 %v330
    %v415 = vunpack.c.h.b16 %v330
    %v416 = vunpack.c.l.b16 %v331
    %v417 = vunpack.c.l.b16 %v332
    %v418 = vunpack.c.h.b16 %v332
    %v419 = vunpack.c.l.b16 %v333
    %v420 = vunpack.c.l.b16 %v334
    %v421 = vunpack.c.h.b16 %v334
    %v422 = vunpack.c.l.b16 %v335
    %v423 = vunpack.c.l.b16 %v336
    %v424 = vunpack.c.h.b16 %v336
    %v425 = vunpack.c.l.b16 %v337
    %v426 = vpack.c.b16 %v381, %v378
    %v427 = vpack.c.b16 %v382, %v379
    %v428 = vpack.c.b16 %v383, %v380
    %v429 = vpack.c.b16 %v387, %v384
    %v430 = vpack.c.b16 %v388, %v385
    %v431 = vpack.c.b16 %v389, %v386
    %v432 = vpack.c.b16 %v393, %v390
    %v433 = vpack.c.b16 %v394, %v391
    %v434 = vpack.c.b16 %v395, %v392
    %v435 = vpack.c.b16 %v399, %v396
    %v436 = vpack.c.b16 %v400, %v397
    %v437 = vpack.c.b16 %v401, %v398
    %v438 = vpack.c.b16 %v405, %v402
    %v439 = vpack.c.b16 %v406, %v403
    %v440 = vpack.c.b16 %v407, %v404
    %v441 = vpack.c.b16 %v411, %v408
    %v442 = vpack.c.b16 %v412, %v409
    %v443 = vpack.c.b16 %v413, %v410
    %v444 = vpack.c.b16 %v417, %v414
    %v445 = vpack.c.b16 %v418, %v415
    %v446 = vpack.c.b16 %v419, %v416
    %v447 = vpack.c.b16 %v423, %v420
    %v448 = vpack.c.b16 %v424, %v421
    %v449 = vpack.c.b16 %v425, %v422
    %474 = vmatpush.bf16.msra.mxu0 %v447
    %475 = vmatpush.bf16.msra.mxu0 %v444
    %476 = vmatpush.bf16.msra.mxu0 %v441
    %477 = vmatpush.bf16.msra.mxu0 %v438
    %478 = vmatpush.bf16.msra.mxu0 %v435
    %479 = vmatpush.bf16.msra.mxu0 %v432
    %480 = vmatpush.bf16.msra.mxu0 %v429
    %481 = vmatpush.bf16.msra.mxu0 %v426
    %482 = vmatmul.bf16.gmra.mxu0 %v305
    %v483 = vpop.f32.mrf.mxu0
    %v484 = vadd.f32 %v340, %v483
    %v485 = vpop.f32.mrf.mxu0
    %v486 = vadd.f32 %v340, %v485
    %487 = vdwg.mxu0
    %488 = vmatpush.bf16.msra.mxu0 %v448
    %489 = vmatpush.bf16.msra.mxu0 %v445
    %490 = vmatpush.bf16.msra.mxu0 %v442
    %491 = vmatpush.bf16.msra.mxu0 %v439
    %492 = vmatpush.bf16.msra.mxu0 %v436
    %493 = vmatpush.bf16.msra.mxu0 %v433
    %494 = vmatpush.bf16.msra.mxu0 %v430
    %495 = vmatpush.bf16.msra.mxu0 %v427
    %496 = vmatmul.bf16.gmra.mxu0 %v305
    %v497 = vpop.f32.mrf.mxu0
    %v498 = vadd.f32 %v341, %v497
    %v499 = vpop.f32.mrf.mxu0
    %v500 = vadd.f32 %v341, %v499
    %501 = vdwg.mxu0
    %502 = vmatpush.bf16.msra.mxu0 %v449
    %503 = vmatpush.bf16.msra.mxu0 %v446
    %504 = vmatpush.bf16.msra.mxu0 %v443
    %505 = vmatpush.bf16.msra.mxu0 %v440
    %506 = vmatpush.bf16.msra.mxu0 %v437
    %507 = vmatpush.bf16.msra.mxu0 %v434
    %508 = vmatpush.bf16.msra.mxu0 %v431
    %509 = vmatpush.bf16.msra.mxu0 %v428
    %510 = vmatmul.bf16.gmra.mxu0 %v305
    %v511 = vpop.f32.mrf.mxu0
    %v512 = vadd.f32 %v342, %v511
    %v513 = vpop.f32.mrf.mxu0
    %v514 = vadd.f32 %v342, %v513
    %515 = vdwg.mxu0
    %v516 = vxor.u32 %v484, 2147483648
    %v517 = vxor.u32 %v486, 2147483648
    %v518 = vmul.f32 %v516, 1.442695
    %v519 = vpow.pop %v518
    %v520 = vmul.f32 %v517, 1.442695
    %v521 = vpow.pop %v520
    %v522 = vadd.f32 %v519, 1.0
    %v523 = vadd.f32 %v521, 1.0
    %v524 = vrcp.pop %v522
    %v525 = vmul.f32 %v522, %v524
    %v526 = vsub.f32 1.0, %v525
    %v527 = vmul.f32 %v524, %v526
    %v528 = vadd.f32 %v524, %v527
    %vm529 = vweird.f32 %v522
    %vm530 = vweird.f32 %v524
    %vm531 = vmor %vm529, %vm530
    %v532 = vsel %vm531, %v524, %v528
    %v533 = vand.u32 2147483647, %v522
    %vm534 = vcmp.eq.f32.partialorder %v533, 8.507059e+37
    %v535 = vand.u32 %v522, 2147483648
    %v536 = vor.u32 1.1754944e-38, %v535
    %v537 = vsel %vm534, %v536, %v532
    %v538 = vmul.f32 1.0, %v537
    %v539 = vrcp.pop %v523
    %v540 = vmul.f32 %v523, %v539
    %v541 = vsub.f32 1.0, %v540
    %v542 = vmul.f32 %v539, %v541
    %v543 = vadd.f32 %v539, %v542
    %vm544 = vweird.f32 %v523
    %vm545 = vweird.f32 %v539
    %vm546 = vmor %vm544, %vm545
    %v547 = vsel %vm546, %v539, %v543
    %v548 = vand.u32 2147483647, %v523
    %vm549 = vcmp.eq.f32.partialorder %v548, 8.507059e+37
    %v550 = vand.u32 %v523, 2147483648
    %v551 = vor.u32 1.1754944e-38, %v550
    %v552 = vsel %vm549, %v551, %v547
    %v553 = vmul.f32 1.0, %v552
    %v554 = vtanh.pop %v498
    %v555 = vtanh.pop %v500
    %v556 = vxor.u32 %v512, 2147483648
    %v557 = vxor.u32 %v514, 2147483648
    %v558 = vmul.f32 %v556, 1.442695
    %v559 = vpow.pop %v558
    %v560 = vmul.f32 %v557, 1.442695
    %v561 = vpow.pop %v560
    %v562 = vadd.f32 %v559, 1.0
    %v563 = vadd.f32 %v561, 1.0
    %v564 = vrcp.pop %v562
    %v565 = vmul.f32 %v562, %v564
    %v566 = vsub.f32 1.0, %v565
    %v567 = vmul.f32 %v564, %v566
    %v568 = vadd.f32 %v564, %v567
    %vm569 = vweird.f32 %v562
    %vm570 = vweird.f32 %v564
    %vm571 = vmor %vm569, %vm570
    %v572 = vsel %vm571, %v564, %v568
    %v573 = vand.u32 2147483647, %v562
    %vm574 = vcmp.eq.f32.partialorder %v573, 8.507059e+37
    %v575 = vand.u32 %v562, 2147483648
    %v576 = vor.u32 1.1754944e-38, %v575
    %v577 = vsel %vm574, %v576, %v572
    %v578 = vmul.f32 1.0, %v577
    %v579 = vrcp.pop %v563
    %v580 = vmul.f32 %v563, %v579
    %v581 = vsub.f32 1.0, %v580
    %v582 = vmul.f32 %v579, %v581
    %v583 = vadd.f32 %v579, %v582
    %vm584 = vweird.f32 %v563
    %vm585 = vweird.f32 %v579
    %vm586 = vmor %vm584, %vm585
    %v587 = vsel %vm586, %v579, %v583
    %v588 = vand.u32 2147483647, %v563
    %vm589 = vcmp.eq.f32.partialorder %v588, 8.507059e+37
    %v590 = vand.u32 %v563, 2147483648
    %v591 = vor.u32 1.1754944e-38, %v590
    %v592 = vsel %vm589, %v591, %v587
    %v593 = vmul.f32 1.0, %v592
    %v594 = vmul.f32 %v538, %v554
    %v595 = vmul.f32 %v553, %v555
    %v596 = vtanh.pop %v594
    %v597 = vtanh.pop %v595
    %v598 = vmul.f32 %v578, %v596
    %v599 = vmul.f32 %v593, %v597
    %v600 = vpack.c.bf16 %v599, %v598
    %v601 = vld [vmem:[%s5] sm:$0xf]
    %v602 = vld [vmem:[%s5 + $0x4] sm:$0xf]
    %v603 = vld [vmem:[%s5 + $0x8] sm:$0xf]
    %v604 = vld [vmem:[%s5 + $0xc] sm:$0xf]
    %v605 = vld [vmem:[%s5 + $0x10] sm:$0xf]
    %v606 = vld [vmem:[%s5 + $0x14] sm:$0xf]
    %v607 = vld [vmem:[%s5 + $0x18] sm:$0xf]
    %v608 = vld [vmem:[%s5 + $0x1c] sm:$0xf]
    %v609 = vld [vmem:[%s5 + $0x20] sm:$0xf]
    %v610 = vld [vmem:[%s5 + $0x24] sm:$0xf]
    %v611 = vld [vmem:[%s5 + $0x28] sm:$0xf]
    %v612 = vld [vmem:[%s5 + $0x2c] sm:$0xf]
    %v613 = vld [vmem:[%s5 + $0x30] sm:$0xf]
    %v614 = vld [vmem:[%s5 + $0x34] sm:$0xf]
    %v615 = vld [vmem:[%s5 + $0x38] sm:$0xf]
    %v616 = vld [vmem:[%s5 + $0x3c] sm:$0xf]
    %v617 = vld [vmem:[%s6] sm:$0x1]
    %v619 = vperm.slane %v617, 0
    %v637 = vunpack.c.l.b16 %v601
    %v638 = vunpack.c.l.b16 %v602
    %v639 = vunpack.c.l.b16 %v603
    %v640 = vunpack.c.l.b16 %v604
    %v641 = vunpack.c.l.b16 %v605
    %v642 = vunpack.c.l.b16 %v606
    %v643 = vunpack.c.l.b16 %v607
    %v644 = vunpack.c.l.b16 %v608
    %v645 = vunpack.c.l.b16 %v609
    %v646 = vunpack.c.l.b16 %v610
    %v647 = vunpack.c.l.b16 %v611
    %v648 = vunpack.c.l.b16 %v612
    %v649 = vunpack.c.l.b16 %v613
    %v650 = vunpack.c.l.b16 %v614
    %v651 = vunpack.c.l.b16 %v615
    %v652 = vunpack.c.l.b16 %v616
    %v653 = vpack.c.b16 %v638, %v637
    %v654 = vpack.c.b16 %v640, %v639
    %v655 = vpack.c.b16 %v642, %v641
    %v656 = vpack.c.b16 %v644, %v643
    %v657 = vpack.c.b16 %v646, %v645
    %v658 = vpack.c.b16 %v648, %v647
    %v659 = vpack.c.b16 %v650, %v649
    %v660 = vpack.c.b16 %v652, %v651
    %669 = vmatpush.bf16.msra.mxu0 %v660
    %670 = vmatpush.bf16.msra.mxu0 %v659
    %671 = vmatpush.bf16.msra.mxu0 %v658
    %672 = vmatpush.bf16.msra.mxu0 %v657
    %673 = vmatpush.bf16.msra.mxu0 %v656
    %674 = vmatpush.bf16.msra.mxu0 %v655
    %675 = vmatpush.bf16.msra.mxu0 %v654
    %676 = vmatpush.bf16.msra.mxu0 %v653
    %677 = vmatmul.bf16.gmra.mxu0 %v600
    %v678 = vpop.f32.mrf.mxu0
    %v679 = vadd.f32 %v619, %v678
    %v680 = vpop.f32.mrf.mxu0
    %v681 = vadd.f32 %v619, %v680
    %682 = vdwg.mxu0
    %v683 = vmax.f32 %v679, 0.0
    %v684 = vmax.f32 %v681, 0.0
    %v685 = vld [vmem:[%s7] sm:$0x1]
    %v687 = vperm.slane %v685, 0
    %v689 = vmul.f32 %v683, %v687
    %v690 = vmul.f32 %v684, %v687
    %v691 = vsel %vm175, %v689, 0.0
    %692 = vadd.xlane.f32.xlu0 %v691
    %v693 = vpop.xlane.xlu0 %692
    %v694 = vsel %vm175, %v690, 0.0
    %695 = vadd.xlane.f32.xlu0 %v694
    %v696 = vpop.xlane.xlu0 %695
    %v697 = vld [vmem:[#allocation2] sm:$0x1]
    %v699 = vperm.slane %v697, 0
    %v701 = vadd.f32 %v693, %v699
    %v702 = vadd.f32 %v696, %v699
    %vm703 = vcmask 7168
    %704 = vst.msk [vmem:[%s9] sm:$0xff] %vm703, %v701
    %705 = vst.msk [vmem:[%s9 + $0x8] sm:$0xff] %vm703, %v702
    // Predicated region
    $region50: #{tpu_custom_call.1} parent=1 // pred_check
      _
    $region51: #{tpu_custom_call.1} parent=1 // pred_check_branch
      %707 = sbr.rel (0) target = $region53
    $region52: #{tpu_custom_call.1} parent=1 // pred_region
      _
    $region53: #{tpu_custom_call.1} parent=1 // pred_fallthru
      _
    // Predicated region
    $region54: #{tpu_custom_call.1} parent=1 // pred_check
      _
    $region55: #{tpu_custom_call.1} parent=1 // pred_check_branch
      %709 = sbr.rel (0) target = $region57
    $region56: #{tpu_custom_call.1} parent=1 // pred_region
      _
    $region57: #{tpu_custom_call.1} parent=1 // pred_fallthru
      _
    %710 = vsyncpa [#allocation4], 1
    %711 = vsyncpa [#allocation6], 1

</llo_original>
